<compile_context>
chip_gen: v6e
topology: v6e:2x2x1
jax: 0.10.0
libtpu: 0.0.40
codegen_flags: <defaults>
</compile_context>

<pallas_src>
import jax
import jax.numpy as jnp
from jax.experimental import pallas as pl
from jax.experimental.pallas import tpu as pltpu

INPUT_SIZE = 5
HIDDEN1 = 128
HIDDEN2 = 256
OUTPUT_SIZE = 5
MAX_BLOCK_B = 2048  # batch tile cap; only multiples of 8 matter for the M axis


def _round_up(x, m):
    return ((x + m - 1) // m) * m


def net_kernel(x_ref, w1_ref, b1_ref, w2_ref, b2_ref, w3_ref, b3_ref, o_ref):
    # 3-layer MLP, no activations (nn.Sequential of three nn.Linear).
    x = x_ref[...]            # (block_b, 5)
    w1 = w1_ref[...]          # (5, 128)

    # Layer 1 on the VPU: K=5 would waste an entire MXU pass, and the MXU is the
    # binding unit in-kernel while VALU/XLU have slack.  Static 5-step unrolled
    # broadcast multiply-add chain (same 5-term sum, ~1e-7 rel. diff vs MXU).
    h1 = b1_ref[...] + x[:, 0:1] * w1[0:1, :]
    for k in range(1, INPUT_SIZE):
        h1 = h1 + x[:, k:k + 1] * w1[k:k + 1, :]

    # Layers 2 and 3 on the MXU with f32 accumulation.
    h2 = jnp.dot(h1, w2_ref[...], preferred_element_type=jnp.float32) + b2_ref[...]
    out = jnp.dot(h2, w3_ref[...], preferred_element_type=jnp.float32) + b3_ref[...]
    o_ref[...] = out.astype(o_ref.dtype)


def net_forward(x, params):
    """x: [B, INPUT_SIZE] float32 -> [B, OUTPUT_SIZE] float32."""
    B = x.shape[0]

    # Batch tile: multiple of 8, capped at MAX_BLOCK_B, and chosen so that B > 8
    # always yields >= 2 grid steps on the "parallel" axis (lets v7x's two
    # TensorCores share the batch; the extra ~0.35 us step is noise on v5e/v6e).
    block_b = min(MAX_BLOCK_B, max(8, _round_up(pl.cdiv(B, 2), 8)))
    grid_b = pl.cdiv(B, block_b)  # ragged final block handled by Pallas (no jnp.pad)

    w1, b1 = params["w1"], params["b1"]
    w2, b2 = params["w2"], params["b2"]
    w3, b3 = params["w3"], params["b3"]

    full = lambda i: (0, 0)  # weights / biases: same whole block every grid step

    out = pl.pallas_call(
        net_kernel,
        out_shape=jax.ShapeDtypeStruct((B, OUTPUT_SIZE), jnp.float32),
        grid_spec=pltpu.PrefetchScalarGridSpec(
            num_scalar_prefetch=0,
            grid=(grid_b,),
            in_specs=[
                pl.BlockSpec((block_b, INPUT_SIZE), lambda i: (i, 0)),  # x tile
                pl.BlockSpec((INPUT_SIZE, HIDDEN1), full),              # w1
                pl.BlockSpec((1, HIDDEN1), full),                       # b1
                pl.BlockSpec((HIDDEN1, HIDDEN2), full),                 # w2
                pl.BlockSpec((1, HIDDEN2), full),                       # b2
                pl.BlockSpec((HIDDEN2, OUTPUT_SIZE), full),             # w3
                pl.BlockSpec((1, OUTPUT_SIZE), full),                   # b3
            ],
            out_specs=pl.BlockSpec((block_b, OUTPUT_SIZE), lambda i: (i, 0)),
        ),
        compiler_params=pltpu.CompilerParams(
            dimension_semantics=("parallel",)),
    )(x, w1, b1, w2, b2, w3, b3)

    return out


def init_params(key):
    """Deterministic init mimicking nn.Linear's U(-1/sqrt(fan_in), 1/sqrt(fan_in)).
    Weights are stored already transposed to [in, out]."""
    ks = jax.random.split(key, 6)

    def lin(kw, kb, fan_in, fan_out):
        bound = 1.0 / jnp.sqrt(fan_in)
        w = jax.random.uniform(kw, (fan_in, fan_out), jnp.float32, -bound, bound)
        b = jax.random.uniform(kb, (1, fan_out), jnp.float32, -bound, bound)
        return w, b

    w1, b1 = lin(ks[0], ks[1], INPUT_SIZE, HIDDEN1)
    w2, b2 = lin(ks[2], ks[3], HIDDEN1, HIDDEN2)
    w3, b3 = lin(ks[4], ks[5], HIDDEN2, OUTPUT_SIZE)
    return dict(w1=w1, b1=b1, w2=w2, b2=b2, w3=w3, b3=b3)


def net_reference(x, p):
    h1 = x @ p["w1"] + p["b1"]
    h2 = h1 @ p["w2"] + p["b2"]
    return h2 @ p["w3"] + p["b3"]


if __name__ == "__main__":
    key = jax.random.PRNGKey(0)
    k_param, k_x1, k_x2, k_x3 = jax.random.split(key, 4)
    params = init_params(k_param)

    # Small batch (multiple of 8): splits into 2 parallel blocks of 8 rows.
    B1 = 16
    x1 = jax.random.normal(k_x1, (B1, INPUT_SIZE), jnp.float32)
    out1 = jax.block_until_ready(net_forward(x1, params))
    ref1 = net_reference(x1, params)
    assert out1.shape == (B1, OUTPUT_SIZE)
    assert jnp.allclose(out1, ref1, atol=1e-5, rtol=1e-5)

    # Batch not a multiple of 8: exercises the ragged final-block path (no padding).
    B2 = 13
    x2 = jax.random.normal(k_x2, (B2, INPUT_SIZE), jnp.float32)
    out2 = jax.block_until_ready(net_forward(x2, params))
    ref2 = net_reference(x2, params)
    assert out2.shape == (B2, OUTPUT_SIZE)
    assert jnp.allclose(out2, ref2, atol=1e-5, rtol=1e-5)

    # Batch where the last of several blocks is ragged (block_b=24, grid=2).
    B3 = 37
    x3 = jax.random.normal(k_x3, (B3, INPUT_SIZE), jnp.float32)
    out3 = jax.block_until_ready(net_forward(x3, params))
    ref3 = net_reference(x3, params)
    assert out3.shape == (B3, OUTPUT_SIZE)
    assert jnp.allclose(out3, ref3, atol=1e-5, rtol=1e-5)

    print("KERNEL_OK")
</pallas_src>

<mosaic_0001>
module attributes {stable_mosaic.version = 11 : i64} {
  func.func @net_kernel(%arg0: i32, %arg1: memref<8x5xf32, #tpu.memory_space<vmem>>, %arg2: memref<5x128xf32, #tpu.memory_space<vmem>>, %arg3: memref<1x128xf32, #tpu.memory_space<vmem>>, %arg4: memref<128x256xf32, #tpu.memory_space<vmem>>, %arg5: memref<1x256xf32, #tpu.memory_space<vmem>>, %arg6: memref<256x5xf32, #tpu.memory_space<vmem>>, %arg7: memref<1x5xf32, #tpu.memory_space<vmem>>, %arg8: memref<8x5xf32, #tpu.memory_space<vmem>>) attributes {dimension_semantics = [#tpu.dimension_semantics<parallel>], iteration_bounds = array<i64: 2>, scalar_prefetch = 0 : i64, scratch_operands = 0 : i64, tpu.core_type = #tpu.core_type<tc>, window_params = [{transform_indices = @transform_0, window_bounds = array<i64: 8, 5>}, {pipeline_mode = #tpu.pipeline_mode<synchronous>, transform_indices = @transform_1, window_bounds = array<i64: 5, 128>}, {pipeline_mode = #tpu.pipeline_mode<synchronous>, transform_indices = @transform_2, window_bounds = array<i64: 1, 128>}, {pipeline_mode = #tpu.pipeline_mode<synchronous>, transform_indices = @transform_3, window_bounds = array<i64: 128, 256>}, {pipeline_mode = #tpu.pipeline_mode<synchronous>, transform_indices = @transform_4, window_bounds = array<i64: 1, 256>}, {pipeline_mode = #tpu.pipeline_mode<synchronous>, transform_indices = @transform_5, window_bounds = array<i64: 256, 5>}, {pipeline_mode = #tpu.pipeline_mode<synchronous>, transform_indices = @transform_6, window_bounds = array<i64: 1, 5>}, {transform_indices = @transform_7, window_bounds = array<i64: 8, 5>}]} {
    %c0 = arith.constant 0 : index
    %c0_0 = arith.constant 0 : index
    %0 = vector.load %arg1[%c0, %c0_0] : memref<8x5xf32, #tpu.memory_space<vmem>>, vector<8x5xf32>
    %c0_1 = arith.constant 0 : index
    %c0_2 = arith.constant 0 : index
    %1 = vector.load %arg2[%c0_1, %c0_2] : memref<5x128xf32, #tpu.memory_space<vmem>>, vector<5x128xf32>
    %c0_3 = arith.constant 0 : index
    %c0_4 = arith.constant 0 : index
    %2 = vector.load %arg3[%c0_3, %c0_4] : memref<1x128xf32, #tpu.memory_space<vmem>>, vector<1x128xf32>
    %3 = vector.extract_strided_slice %0 {offsets = [0, 0], sizes = [8, 1], strides = [1, 1]} : vector<8x5xf32> to vector<8x1xf32>
    %4 = vector.extract_strided_slice %1 {offsets = [0, 0], sizes = [1, 128], strides = [1, 1]} : vector<5x128xf32> to vector<1x128xf32>
    %5 = vector.broadcast %3 : vector<8x1xf32> to vector<8x128xf32>
    %6 = vector.broadcast %4 : vector<1x128xf32> to vector<8x128xf32>
    %7 = arith.mulf %5, %6 : vector<8x128xf32>
    %8 = vector.broadcast %2 : vector<1x128xf32> to vector<8x128xf32>
    %9 = arith.addf %8, %7 : vector<8x128xf32>
    %10 = vector.extract_strided_slice %0 {offsets = [0, 1], sizes = [8, 1], strides = [1, 1]} : vector<8x5xf32> to vector<8x1xf32>
    %11 = vector.extract_strided_slice %1 {offsets = [1, 0], sizes = [1, 128], strides = [1, 1]} : vector<5x128xf32> to vector<1x128xf32>
    %12 = vector.broadcast %10 : vector<8x1xf32> to vector<8x128xf32>
    %13 = vector.broadcast %11 : vector<1x128xf32> to vector<8x128xf32>
    %14 = arith.mulf %12, %13 : vector<8x128xf32>
    %15 = arith.addf %9, %14 : vector<8x128xf32>
    %16 = vector.extract_strided_slice %0 {offsets = [0, 2], sizes = [8, 1], strides = [1, 1]} : vector<8x5xf32> to vector<8x1xf32>
    %17 = vector.extract_strided_slice %1 {offsets = [2, 0], sizes = [1, 128], strides = [1, 1]} : vector<5x128xf32> to vector<1x128xf32>
    %18 = vector.broadcast %16 : vector<8x1xf32> to vector<8x128xf32>
    %19 = vector.broadcast %17 : vector<1x128xf32> to vector<8x128xf32>
    %20 = arith.mulf %18, %19 : vector<8x128xf32>
    %21 = arith.addf %15, %20 : vector<8x128xf32>
    %22 = vector.extract_strided_slice %0 {offsets = [0, 3], sizes = [8, 1], strides = [1, 1]} : vector<8x5xf32> to vector<8x1xf32>
    %23 = vector.extract_strided_slice %1 {offsets = [3, 0], sizes = [1, 128], strides = [1, 1]} : vector<5x128xf32> to vector<1x128xf32>
    %24 = vector.broadcast %22 : vector<8x1xf32> to vector<8x128xf32>
    %25 = vector.broadcast %23 : vector<1x128xf32> to vector<8x128xf32>
    %26 = arith.mulf %24, %25 : vector<8x128xf32>
    %27 = arith.addf %21, %26 : vector<8x128xf32>
    %28 = vector.extract_strided_slice %0 {offsets = [0, 4], sizes = [8, 1], strides = [1, 1]} : vector<8x5xf32> to vector<8x1xf32>
    %29 = vector.extract_strided_slice %1 {offsets = [4, 0], sizes = [1, 128], strides = [1, 1]} : vector<5x128xf32> to vector<1x128xf32>
    %30 = vector.broadcast %28 : vector<8x1xf32> to vector<8x128xf32>
    %31 = vector.broadcast %29 : vector<1x128xf32> to vector<8x128xf32>
    %32 = arith.mulf %30, %31 : vector<8x128xf32>
    %33 = arith.addf %27, %32 : vector<8x128xf32>
    %c0_5 = arith.constant 0 : index
    %c0_6 = arith.constant 0 : index
    %34 = vector.load %arg4[%c0_5, %c0_6] : memref<128x256xf32, #tpu.memory_space<vmem>>, vector<128x256xf32>
    %cst = arith.constant dense<0.000000e+00> : vector<8x256xf32>
    %35 = tpu.matmul %33, %34, %cst {dimension_numbers = #tpu.dot_dimension_numbers<[1], [0], [0], [1], [0, 0, 1, 1], [], []>} : vector<8x128xf32>, vector<128x256xf32>, vector<8x256xf32> -> vector<8x256xf32>
    %c0_7 = arith.constant 0 : index
    %c0_8 = arith.constant 0 : index
    %36 = vector.load %arg5[%c0_7, %c0_8] : memref<1x256xf32, #tpu.memory_space<vmem>>, vector<1x256xf32>
    %37 = vector.broadcast %36 : vector<1x256xf32> to vector<8x256xf32>
    %38 = arith.addf %35, %37 : vector<8x256xf32>
    %c0_9 = arith.constant 0 : index
    %c0_10 = arith.constant 0 : index
    %39 = vector.load %arg6[%c0_9, %c0_10] : memref<256x5xf32, #tpu.memory_space<vmem>>, vector<256x5xf32>
    %cst_11 = arith.constant dense<0.000000e+00> : vector<8x5xf32>
    %40 = tpu.matmul %38, %39, %cst_11 {dimension_numbers = #tpu.dot_dimension_numbers<[1], [0], [0], [1], [0, 0, 1, 1], [], []>} : vector<8x256xf32>, vector<256x5xf32>, vector<8x5xf32> -> vector<8x5xf32>
    %c0_12 = arith.constant 0 : index
    %c0_13 = arith.constant 0 : index
    %41 = vector.load %arg7[%c0_12, %c0_13] : memref<1x5xf32, #tpu.memory_space<vmem>>, vector<1x5xf32>
    %42 = vector.broadcast %41 : vector<1x5xf32> to vector<8x5xf32>
    %43 = arith.addf %40, %42 : vector<8x5xf32>
    %c0_14 = arith.constant 0 : index
    %c0_15 = arith.constant 0 : index
    %44 = vector.load %arg8[%c0_14, %c0_15] : memref<8x5xf32, #tpu.memory_space<vmem>>, vector<8x5xf32>
    tpu.vector_store %arg8[%c0_14, %c0_15], %43 {strides = array<i32>} : memref<8x5xf32, #tpu.memory_space<vmem>>, vector<8x5xf32>,
    return
  }
  func.func @transform_0(%arg0: i32) -> (i32, i32) {
    %c0_i32 = arith.constant 0 : i32
    %c0_i32_0 = arith.constant 0 : i32
    return %arg0, %c0_i32 : i32, i32
  }
  func.func @transform_1(%arg0: i32) -> (i32, i32) {
    %c0_i32 = arith.constant 0 : i32
    %c0_i32_0 = arith.constant 0 : i32
    %c0_i32_1 = arith.constant 0 : i32
    return %c0_i32, %c0_i32_0 : i32, i32
  }
  func.func @transform_2(%arg0: i32) -> (i32, i32) {
    %c0_i32 = arith.constant 0 : i32
    %c0_i32_0 = arith.constant 0 : i32
    %c0_i32_1 = arith.constant 0 : i32
    return %c0_i32, %c0_i32_0 : i32, i32
  }
  func.func @transform_3(%arg0: i32) -> (i32, i32) {
    %c0_i32 = arith.constant 0 : i32
    %c0_i32_0 = arith.constant 0 : i32
    %c0_i32_1 = arith.constant 0 : i32
    return %c0_i32, %c0_i32_0 : i32, i32
  }
  func.func @transform_4(%arg0: i32) -> (i32, i32) {
    %c0_i32 = arith.constant 0 : i32
    %c0_i32_0 = arith.constant 0 : i32
    %c0_i32_1 = arith.constant 0 : i32
    return %c0_i32, %c0_i32_0 : i32, i32
  }
  func.func @transform_5(%arg0: i32) -> (i32, i32) {
    %c0_i32 = arith.constant 0 : i32
    %c0_i32_0 = arith.constant 0 : i32
    %c0_i32_1 = arith.constant 0 : i32
    return %c0_i32, %c0_i32_0 : i32, i32
  }
  func.func @transform_6(%arg0: i32) -> (i32, i32) {
    %c0_i32 = arith.constant 0 : i32
    %c0_i32_0 = arith.constant 0 : i32
    %c0_i32_1 = arith.constant 0 : i32
    return %c0_i32, %c0_i32_0 : i32, i32
  }
  func.func @transform_7(%arg0: i32) -> (i32, i32) {
    %c0_i32 = arith.constant 0 : i32
    %c0_i32_0 = arith.constant 0 : i32
    return %arg0, %c0_i32 : i32, i32
  }
}

</mosaic_0001>

<llo_original>
// kernel: tpu_custom_call.1
$region0: #{tpu_custom_call.1}
  #allocation0 [shape = 'u32[]', space=smem, size = 0x4, offset = 0x4, fixed_abs, tag = 'smem constant byte address 0x4 - core index']
  #allocation1 [shape = 'u32[144,128]{1,0:T(1,128)}', space=vmem, size = 0x12000, scoped, tag = 'internal scratch']
  %s0 = inlined_call_operand.vmem [shape: f32[16,5], index: 0, kind: input, shape index: {}]
  %s1 = inlined_call_operand.vmem [shape: f32[5,128], index: 1, kind: input, shape index: {}]
  %s2 = inlined_call_operand.vmem [shape: f32[1,128], index: 2, kind: input, shape index: {}]
  %s3 = inlined_call_operand.vmem [shape: f32[128,256], index: 3, kind: input, shape index: {}]
  %s4 = inlined_call_operand.vmem [shape: f32[1,256], index: 4, kind: input, shape index: {}]
  %s5 = inlined_call_operand.vmem [shape: f32[256,5], index: 5, kind: input, shape index: {}]
  %s6 = inlined_call_operand.vmem [shape: f32[1,5], index: 6, kind: input, shape index: {}]
  %s7 = inlined_call_operand.vmem [shape: f32[16,5], index: 7, kind: output, shape index: {}]
  %s8 = sld [smem:[#allocation0]]
  $region61: #{tpu_custom_call.1} parent=0
    _
  %s10 = ssub.s32 1, %s8
  %s11 = scalar_select 0, %s10, %s8
  loop: start=0, step=1, limit=4
  $region2: #{tpu_custom_call.1} parent=0 // loop_pre_header
    _
  $region3: #{tpu_custom_call.1} parent=0 // loop_header
    %s13 = sphi 0, %s17
    %p14 = scmp.ge.s32.totalorder %s13, 4
    %s23 = sphi 0, %s25
    %s26 = sphi 0, %s23
    %s27 = sphi 0, %s26
    %s43 = sphi 0, %s27
    %s47 = sphi 0, %s47
    %s49 = sphi 0, %s47
    %s50 = sphi 0, %s49
    %s64 = sphi 0, %s50
    %s68 = sphi 0, %s68
    %s70 = sphi 0, %s68
    %s71 = sphi 0, %s70
    %s85 = sphi 0, %s71
    %s89 = sphi 0, %s89
    %s91 = sphi 0, %s89
    %s92 = sphi 0, %s91
    %s106 = sphi 0, %s92
    %s110 = sphi 0, %s110
    %s112 = sphi 0, %s110
    %s113 = sphi 0, %s112
    %s127 = sphi 0, %s113
    %s131 = sphi 0, %s131
    %s133 = sphi 0, %s131
    %s134 = sphi 0, %s133
    %s148 = sphi 0, %s134
    %s152 = sphi 0, %s152
    %s154 = sphi 0, %s152
    %s155 = sphi 0, %s154
    %s169 = sphi 0, %s155
    %s175 = sphi 0, %s177
    %s178 = sphi 0, %s175
    %s179 = sphi 0, %s178
    %s195 = sphi 0, %s179
  $region4: #{tpu_custom_call.1} parent=0 // loop_header_branch
    %16 = sbr.rel (%p14) target = $region8
  $region5: #{tpu_custom_call.1} parent=0 // loop_body
    %s18 = ssub.s32 %s13, 1
    %s19 = ssub.s32 %s13, 2
    %s20 = sadd.s32 %s13, 1
    %s21 = ssub.s32 %s13, %s20
    %p22 = scmp.eq.s32.totalorder %s21, 0
    %s24 = sadd.s32 %s23, 1
    %s25 = scalar_select %p22, %s23, %s24
    %p28 = pneg %p22
    %p29 = scmp.eq.s32.totalorder %s13, 1
    %p30 = por %p28, %p29
    %p31 = scmp.ne.s32.totalorder %s23, %s26
    %p32 = scmp.eq.s32.totalorder %s13, 0
    %p33 = por %p31, %p32
    %p34 = scmp.ne.s32.totalorder %s23, %s26
    %p35 = scmp.eq.s32.totalorder %s18, 1
    %p36 = por %p34, %p35
    %p37 = scmp.ne.s32.totalorder %s26, %s27
    %p38 = scmp.eq.s32.totalorder %s18, 0
    %p39 = por %p37, %p38
    %p40 = scmp.ne.s32.totalorder %s26, %s27
    %p41 = scmp.eq.s32.totalorder %s19, 1
    %p42 = por %p40, %p41
    %p44 = scmp.ne.s32.totalorder %s27, %s43
    %p45 = scmp.eq.s32.totalorder %s19, 0
    %p46 = por %p44, %p45
    %s48 = sadd.s32 %s47, 1
    %p51 = scmp.eq.s32.totalorder %s13, 1
    %p52 = scmp.ne.s32.totalorder %s47, %s49
    %p53 = scmp.eq.s32.totalorder %s13, 0
    %p54 = por %p52, %p53
    %p55 = scmp.ne.s32.totalorder %s47, %s49
    %p56 = scmp.eq.s32.totalorder %s18, 1
    %p57 = por %p55, %p56
    %p58 = scmp.ne.s32.totalorder %s49, %s50
    %p59 = scmp.eq.s32.totalorder %s18, 0
    %p60 = por %p58, %p59
    %p61 = scmp.ne.s32.totalorder %s49, %s50
    %p62 = scmp.eq.s32.totalorder %s19, 1
    %p63 = por %p61, %p62
    %p65 = scmp.ne.s32.totalorder %s50, %s64
    %p66 = scmp.eq.s32.totalorder %s19, 0
    %p67 = por %p65, %p66
    %s69 = sadd.s32 %s68, 1
    %p72 = scmp.eq.s32.totalorder %s13, 1
    %p73 = scmp.ne.s32.totalorder %s68, %s70
    %p74 = scmp.eq.s32.totalorder %s13, 0
    %p75 = por %p73, %p74
    %p76 = scmp.ne.s32.totalorder %s68, %s70
    %p77 = scmp.eq.s32.totalorder %s18, 1
    %p78 = por %p76, %p77
    %p79 = scmp.ne.s32.totalorder %s70, %s71
    %p80 = scmp.eq.s32.totalorder %s18, 0
    %p81 = por %p79, %p80
    %p82 = scmp.ne.s32.totalorder %s70, %s71
    %p83 = scmp.eq.s32.totalorder %s19, 1
    %p84 = por %p82, %p83
    %p86 = scmp.ne.s32.totalorder %s71, %s85
    %p87 = scmp.eq.s32.totalorder %s19, 0
    %p88 = por %p86, %p87
    %s90 = sadd.s32 %s89, 1
    %p93 = scmp.eq.s32.totalorder %s13, 1
    %p94 = scmp.ne.s32.totalorder %s89, %s91
    %p95 = scmp.eq.s32.totalorder %s13, 0
    %p96 = por %p94, %p95
    %p97 = scmp.ne.s32.totalorder %s89, %s91
    %p98 = scmp.eq.s32.totalorder %s18, 1
    %p99 = por %p97, %p98
    %p100 = scmp.ne.s32.totalorder %s91, %s92
    %p101 = scmp.eq.s32.totalorder %s18, 0
    %p102 = por %p100, %p101
    %p103 = scmp.ne.s32.totalorder %s91, %s92
    %p104 = scmp.eq.s32.totalorder %s19, 1
    %p105 = por %p103, %p104
    %p107 = scmp.ne.s32.totalorder %s92, %s106
    %p108 = scmp.eq.s32.totalorder %s19, 0
    %p109 = por %p107, %p108
    %s111 = sadd.s32 %s110, 1
    %p114 = scmp.eq.s32.totalorder %s13, 1
    %p115 = scmp.ne.s32.totalorder %s110, %s112
    %p116 = scmp.eq.s32.totalorder %s13, 0
    %p117 = por %p115, %p116
    %p118 = scmp.ne.s32.totalorder %s110, %s112
    %p119 = scmp.eq.s32.totalorder %s18, 1
    %p120 = por %p118, %p119
    %p121 = scmp.ne.s32.totalorder %s112, %s113
    %p122 = scmp.eq.s32.totalorder %s18, 0
    %p123 = por %p121, %p122
    %p124 = scmp.ne.s32.totalorder %s112, %s113
    %p125 = scmp.eq.s32.totalorder %s19, 1
    %p126 = por %p124, %p125
    %p128 = scmp.ne.s32.totalorder %s113, %s127
    %p129 = scmp.eq.s32.totalorder %s19, 0
    %p130 = por %p128, %p129
    %s132 = sadd.s32 %s131, 1
    %p135 = scmp.eq.s32.totalorder %s13, 1
    %p136 = scmp.ne.s32.totalorder %s131, %s133
    %p137 = scmp.eq.s32.totalorder %s13, 0
    %p138 = por %p136, %p137
    %p139 = scmp.ne.s32.totalorder %s131, %s133
    %p140 = scmp.eq.s32.totalorder %s18, 1
    %p141 = por %p139, %p140
    %p142 = scmp.ne.s32.totalorder %s133, %s134
    %p143 = scmp.eq.s32.totalorder %s18, 0
    %p144 = por %p142, %p143
    %p145 = scmp.ne.s32.totalorder %s133, %s134
    %p146 = scmp.eq.s32.totalorder %s19, 1
    %p147 = por %p145, %p146
    %p149 = scmp.ne.s32.totalorder %s134, %s148
    %p150 = scmp.eq.s32.totalorder %s19, 0
    %p151 = por %p149, %p150
    %s153 = sadd.s32 %s152, 1
    %p156 = scmp.eq.s32.totalorder %s13, 1
    %p157 = scmp.ne.s32.totalorder %s152, %s154
    %p158 = scmp.eq.s32.totalorder %s13, 0
    %p159 = por %p157, %p158
    %p160 = scmp.ne.s32.totalorder %s152, %s154
    %p161 = scmp.eq.s32.totalorder %s18, 1
    %p162 = por %p160, %p161
    %p163 = scmp.ne.s32.totalorder %s154, %s155
    %p164 = scmp.eq.s32.totalorder %s18, 0
    %p165 = por %p163, %p164
    %p166 = scmp.ne.s32.totalorder %s154, %s155
    %p167 = scmp.eq.s32.totalorder %s19, 1
    %p168 = por %p166, %p167
    %p170 = scmp.ne.s32.totalorder %s155, %s169
    %p171 = scmp.eq.s32.totalorder %s19, 0
    %p172 = por %p170, %p171
    %s173 = ssub.s32 %s13, %s20
    %p174 = scmp.eq.s32.totalorder %s173, 0
    %s176 = sadd.s32 %s175, 1
    %s177 = scalar_select %p174, %s175, %s176
    %p180 = pneg %p174
    %p181 = scmp.eq.s32.totalorder %s13, 1
    %p182 = por %p180, %p181
    %p183 = scmp.ne.s32.totalorder %s175, %s178
    %p184 = scmp.eq.s32.totalorder %s13, 0
    %p185 = por %p183, %p184
    %p186 = scmp.ne.s32.totalorder %s175, %s178
    %p187 = scmp.eq.s32.totalorder %s18, 1
    %p188 = por %p186, %p187
    %p189 = scmp.ne.s32.totalorder %s178, %s179
    %p190 = scmp.eq.s32.totalorder %s18, 0
    %p191 = por %p189, %p190
    %p192 = scmp.ne.s32.totalorder %s178, %s179
    %p193 = scmp.eq.s32.totalorder %s19, 1
    %p194 = por %p192, %p193
    %p196 = scmp.ne.s32.totalorder %s179, %s195
    %p197 = scmp.eq.s32.totalorder %s19, 0
    %p198 = por %p196, %p197
    %p199 = scmp.le.s32.totalorder 1, %s13
    %p200 = scmp.lt.s32.totalorder %s13, 3
    %p201 = pnand %p199, %p200
    %p202 = pneg %p201
    // Predicated region
    $region9: #{tpu_custom_call.1} parent=5 // pred_check
      _
    $region10: #{tpu_custom_call.1} parent=5 // pred_check_branch
      %204 = sbr.rel (%p201) target = $region12
    $region11: #{tpu_custom_call.1} parent=5 // pred_region
      %s205 = ssub.s32 %s13, 1
      // Predicated region
      $region13: #{tpu_custom_call.1} parent=11 // pred_check
        %p206 = pneg %p60
      $region14: #{tpu_custom_call.1} parent=11 // pred_check_branch
        %208 = sbr.rel (%p206) target = $region16
      $region15: #{tpu_custom_call.1} parent=11 // pred_region
        _
      $region16: #{tpu_custom_call.1} parent=11 // pred_fallthru
        _
      // Predicated region
      $region17: #{tpu_custom_call.1} parent=11 // pred_check
        %p209 = pneg %p81
      $region18: #{tpu_custom_call.1} parent=11 // pred_check_branch
        %211 = sbr.rel (%p209) target = $region20
      $region19: #{tpu_custom_call.1} parent=11 // pred_region
        _
      $region20: #{tpu_custom_call.1} parent=11 // pred_fallthru
        _
      // Predicated region
      $region21: #{tpu_custom_call.1} parent=11 // pred_check
        %p212 = pneg %p102
      $region22: #{tpu_custom_call.1} parent=11 // pred_check_branch
        %214 = sbr.rel (%p212) target = $region24
      $region23: #{tpu_custom_call.1} parent=11 // pred_region
        _
      $region24: #{tpu_custom_call.1} parent=11 // pred_fallthru
        _
      // Predicated region
      $region25: #{tpu_custom_call.1} parent=11 // pred_check
        %p215 = pneg %p123
      $region26: #{tpu_custom_call.1} parent=11 // pred_check_branch
        %217 = sbr.rel (%p215) target = $region28
      $region27: #{tpu_custom_call.1} parent=11 // pred_region
        _
      $region28: #{tpu_custom_call.1} parent=11 // pred_fallthru
        _
      // Predicated region
      $region29: #{tpu_custom_call.1} parent=11 // pred_check
        %p218 = pneg %p144
      $region30: #{tpu_custom_call.1} parent=11 // pred_check_branch
        %220 = sbr.rel (%p218) target = $region32
      $region31: #{tpu_custom_call.1} parent=11 // pred_region
        _
      $region32: #{tpu_custom_call.1} parent=11 // pred_fallthru
        _
      // Predicated region
      $region33: #{tpu_custom_call.1} parent=11 // pred_check
        %p221 = pneg %p165
      $region34: #{tpu_custom_call.1} parent=11 // pred_check_branch
        %223 = sbr.rel (%p221) target = $region36
      $region35: #{tpu_custom_call.1} parent=11 // pred_region
        _
      $region36: #{tpu_custom_call.1} parent=11 // pred_fallthru
        _
    $region12: #{tpu_custom_call.1} parent=5 // pred_fallthru
      _
    %p224 = scmp.lt.s32.totalorder %s13, 2
    // Predicated region
    $region37: #{tpu_custom_call.1} parent=5 // pred_check
      %p225 = pneg %p224
    $region38: #{tpu_custom_call.1} parent=5 // pred_check_branch
      %227 = sbr.rel (%p225) target = $region40
    $region39: #{tpu_custom_call.1} parent=5 // pred_region
      // Predicated region
      $region41: #{tpu_custom_call.1} parent=39 // pred_check
        %p228 = pneg %p33
      $region42: #{tpu_custom_call.1} parent=39 // pred_check_branch
        %230 = sbr.rel (%p228) target = $region44
      $region43: #{tpu_custom_call.1} parent=39 // pred_region
        %p231 = scmp.lt.s32.totalorder %s13, 1
        %s232 = scalar_select %p231, %s13, 1
        %s233 = smul.addr %s232, 8
        %s234 = scalar_lea.vmem %s0, %s233
      $region44: #{tpu_custom_call.1} parent=39 // pred_fallthru
        _
    $region40: #{tpu_custom_call.1} parent=5 // pred_fallthru
      _
    %p235 = scmp.le.s32.totalorder 1, %s13
    %p236 = scmp.lt.s32.totalorder %s13, 3
    %p237 = pnand %p235, %p236
    %p238 = pneg %p237
    // Predicated region
    $region45: #{tpu_custom_call.1} parent=5 // pred_check
      _
    $region46: #{tpu_custom_call.1} parent=5 // pred_check_branch
      %240 = sbr.rel (%p237) target = $region48
    $region47: #{tpu_custom_call.1} parent=5 // pred_region
      %s241 = ssub.s32 %s13, 1
      %p242 = scmp.lt.s32.totalorder %s18, 1
      %s243 = scalar_select %p242, %s18, 1
      %s244 = smul.addr %s243, 8
      %s245 = scalar_lea.vmem %s0, %s244
      %p246 = pneg %p39
      %p247 = pneg %p36
      %p248 = pneg %p60
      %p249 = pneg %p57
      %p250 = pneg %p81
      %p251 = pneg %p78
      %p252 = pneg %p102
      %p253 = pneg %p99
      %p254 = pneg %p123
      %p255 = pneg %p120
      %p256 = pneg %p144
      %p257 = pneg %p141
      %p258 = pneg %p165
      %p259 = pneg %p162
      %p260 = pneg %p191
      %p261 = pneg %p188
      %p262 = scmp.lt.s32.totalorder %s18, 1
      %s263 = scalar_select %p262, %s18, 1
      %s264 = smul.addr %s263, 8
      %s265 = scalar_lea.vmem %s7, %s264
      %p266 = scmp.lt.s32.totalorder %s18, 1
      %s267 = scalar_select %p266, %s18, 1
      %s268 = smul.addr %s267, 8
      %s269 = scalar_lea.vmem %s0, %s268
      %p270 = scmp.lt.s32.totalorder %s18, 1
      %s271 = scalar_select %p270, %s18, 1
      %s272 = smul.addr %s271, 8
      %s273 = scalar_lea.vmem %s7, %s272
      %v274 = vld [vmem:[%s269] sm:$0xff]
      %v275 = vld [vmem:[%s1] sm:$0x1f]
      %v276 = vld [vmem:[%s2] sm:$0x1]
      %278 = vset.pattern.permute.xlu0 0
      %279 = vperm.xlu0 %278, %v274
      %v280 = vpop.permute.xlu0 %279
      %v282 = vlaneseq
      %v283 = vshrl.u32 %v282, 7
      %v284 = vsub.s32 0, %v283
      %v285 = vrot.slane %v275, %v284
      %v286 = vmul.f32 %v280, %v285
      %v288 = vlaneseq
      %v289 = vshrl.u32 %v288, 7
      %v290 = vsub.s32 0, %v289
      %v291 = vrot.slane %v276, %v290
      %v293 = vadd.f32 %v291, %v286
      %294 = vset.pattern.permute.xlu0 1
      %295 = vperm.xlu0 %294, %v274
      %v296 = vpop.permute.xlu0 %295
      %v298 = vlaneseq
      %v299 = vshrl.u32 %v298, 7
      %v300 = vsub.s32 1, %v299
      %v301 = vrot.slane %v275, %v300
      %v302 = vmul.f32 %v296, %v301
      %v303 = vadd.f32 %v293, %v302
      %304 = vset.pattern.permute.xlu0 2
      %305 = vperm.xlu0 %304, %v274
      %v306 = vpop.permute.xlu0 %305
      %v308 = vlaneseq
      %v309 = vshrl.u32 %v308, 7
      %v310 = vsub.s32 2, %v309
      %v311 = vrot.slane %v275, %v310
      %v312 = vmul.f32 %v306, %v311
      %v313 = vadd.f32 %v303, %v312
      %314 = vset.pattern.permute.xlu0 3
      %315 = vperm.xlu0 %314, %v274
      %v316 = vpop.permute.xlu0 %315
      %v318 = vlaneseq
      %v319 = vshrl.u32 %v318, 7
      %v320 = vsub.s32 3, %v319
      %v321 = vrot.slane %v275, %v320
      %v322 = vmul.f32 %v316, %v321
      %v323 = vadd.f32 %v313, %v322
      %324 = vset.pattern.permute.xlu0 4
      %325 = vperm.xlu0 %324, %v274
      %v326 = vpop.permute.xlu0 %325
      %v328 = vlaneseq
      %v329 = vshrl.u32 %v328, 7
      %v330 = vsub.s32 4, %v329
      %v331 = vrot.slane %v275, %v330
      %v332 = vmul.f32 %v326, %v331
      %v333 = vadd.f32 %v323, %v332
      %v334 = vld [vmem:[%s3] sm:$0xff]
      %v335 = vld [vmem:[%s3 + $0x8] sm:$0xff]
      %v336 = vld [vmem:[%s3 + $0x10] sm:$0xff]
      %v337 = vld [vmem:[%s3 + $0x18] sm:$0xff]
      %v338 = vld [vmem:[%s3 + $0x20] sm:$0xff]
      %v339 = vld [vmem:[%s3 + $0x28] sm:$0xff]
      %v340 = vld [vmem:[%s3 + $0x30] sm:$0xff]
      %v341 = vld [vmem:[%s3 + $0x38] sm:$0xff]
      %v342 = vld [vmem:[%s3 + $0x40] sm:$0xff]
      %v343 = vld [vmem:[%s3 + $0x48] sm:$0xff]
      %v344 = vld [vmem:[%s3 + $0x50] sm:$0xff]
      %v345 = vld [vmem:[%s3 + $0x58] sm:$0xff]
      %v346 = vld [vmem:[%s3 + $0x60] sm:$0xff]
      %v347 = vld [vmem:[%s3 + $0x68] sm:$0xff]
      %v348 = vld [vmem:[%s3 + $0x70] sm:$0xff]
      %v349 = vld [vmem:[%s3 + $0x78] sm:$0xff]
      %v350 = vld [vmem:[%s3 + $0x80] sm:$0xff]
      %v351 = vld [vmem:[%s3 + $0x88] sm:$0xff]
      %v352 = vld [vmem:[%s3 + $0x90] sm:$0xff]
      %v353 = vld [vmem:[%s3 + $0x98] sm:$0xff]
      %v354 = vld [vmem:[%s3 + $0xa0] sm:$0xff]
      %v355 = vld [vmem:[%s3 + $0xa8] sm:$0xff]
      %v356 = vld [vmem:[%s3 + $0xb0] sm:$0xff]
      %v357 = vld [vmem:[%s3 + $0xb8] sm:$0xff]
      %v358 = vld [vmem:[%s3 + $0xc0] sm:$0xff]
      %v359 = vld [vmem:[%s3 + $0xc8] sm:$0xff]
      %v360 = vld [vmem:[%s3 + $0xd0] sm:$0xff]
      %v361 = vld [vmem:[%s3 + $0xd8] sm:$0xff]
      %v362 = vld [vmem:[%s3 + $0xe0] sm:$0xff]
      %v363 = vld [vmem:[%s3 + $0xe8] sm:$0xff]
      %v364 = vld [vmem:[%s3 + $0xf0] sm:$0xff]
      %v365 = vld [vmem:[%s3 + $0xf8] sm:$0xff]
      %v366 = vld [vmem:[%s4] sm:$0x3]
      %v368 = vlaneseq
      %v369 = vshrl.u32 %v368, 7
      %v370 = vsub.s32 0, %v369
      %v371 = vrot.slane %v366, %v370
      %v372 = vlaneseq
      %v373 = vshrl.u32 %v372, 7
      %v374 = vsub.s32 1, %v373
      %v375 = vrot.slane %v366, %v374
      %378 = vmatprep.subr.mxu0 %v365
      %379 = vmatpush1.msra.mxu0 %v364
      %380 = vmatprep.subr.mxu0 %v363
      %381 = vmatpush1.msra.mxu0 %v362
      %382 = vmatprep.subr.mxu0 %v361
      %383 = vmatpush1.msra.mxu0 %v360
      %384 = vmatprep.subr.mxu0 %v359
      %385 = vmatpush1.msra.mxu0 %v358
      %386 = vmatprep.subr.mxu0 %v357
      %387 = vmatpush1.msra.mxu0 %v356
      %388 = vmatprep.subr.mxu0 %v355
      %389 = vmatpush1.msra.mxu0 %v354
      %390 = vmatprep.subr.mxu0 %v353
      %391 = vmatpush1.msra.mxu0 %v352
      %392 = vmatprep.subr.mxu0 %v351
      %393 = vmatpush1.msra.mxu0 %v350
      %394 = vmatprep.subr.mxu0 %v349
      %395 = vmatpush1.msra.mxu0 %v348
      %396 = vmatprep.subr.mxu0 %v347
      %397 = vmatpush1.msra.mxu0 %v346
      %398 = vmatprep.subr.mxu0 %v345
      %399 = vmatpush1.msra.mxu0 %v344
      %400 = vmatprep.subr.mxu0 %v343
      %401 = vmatpush1.msra.mxu0 %v342
      %402 = vmatprep.subr.mxu0 %v341
      %403 = vmatpush1.msra.mxu0 %v340
      %404 = vmatprep.subr.mxu0 %v339
      %405 = vmatpush1.msra.mxu0 %v338
      %406 = vmatprep.subr.mxu0 %v337
      %407 = vmatpush1.msra.mxu0 %v336
      %408 = vmatprep.subr.mxu0 %v335
      %409 = vmatpush1.msra.mxu0 %v334
      %410 = vmatprep.subr.mxu0 0.0
      %411 = vmatpush2.msra.mxu0 0.0
      %412 = vmatprep.subr.mxu0 0.0
      %413 = vmatpush2.msra.mxu0 0.0
      %414 = vmatprep.subr.mxu0 0.0
      %415 = vmatpush2.msra.mxu0 0.0
      %416 = vmatprep.subr.mxu0 0.0
      %417 = vmatpush2.msra.mxu0 0.0
      %418 = vmatprep.subr.mxu0 0.0
      %419 = vmatpush2.msra.mxu0 0.0
      %420 = vmatprep.subr.mxu0 0.0
      %421 = vmatpush2.msra.mxu0 0.0
      %422 = vmatprep.subr.mxu0 0.0
      %423 = vmatpush2.msra.mxu0 0.0
      %424 = vmatprep.subr.mxu0 0.0
      %425 = vmatpush2.msra.mxu0 0.0
      %426 = vmatprep.subr.mxu0 0.0
      %427 = vmatpush2.msra.mxu0 0.0
      %428 = vmatprep.subr.mxu0 0.0
      %429 = vmatpush2.msra.mxu0 0.0
      %430 = vmatprep.subr.mxu0 0.0
      %431 = vmatpush2.msra.mxu0 0.0
      %432 = vmatprep.subr.mxu0 0.0
      %433 = vmatpush2.msra.mxu0 0.0
      %434 = vmatprep.subr.mxu0 0.0
      %435 = vmatpush2.msra.mxu0 0.0
      %436 = vmatprep.subr.mxu0 0.0
      %437 = vmatpush2.msra.mxu0 0.0
      %438 = vmatprep.subr.mxu0 0.0
      %439 = vmatpush2.msra.mxu0 0.0
      %440 = vmatprep.subr.mxu0 0.0
      %441 = vmatpush2.msra.mxu0 0.0
      %442 = vmatprep.mubr.f32.mxu0 0.0
      %443 = vmatmul.mubr.f32.gmra.mxu0 %v333
      %v444 = vpop.f32.mrf.mxu0
      %v445 = vadd.f32 %v371, %v444
      %v446 = vpop.f32.mrf.mxu0
      %v447 = vadd.f32 %v375, %v446
      %448 = vdwg.mxu0
      %v449 = vld [vmem:[%s5] sm:$0xff]
      %v450 = vld [vmem:[%s5 + $0x8] sm:$0xff]
      %v451 = vld [vmem:[%s5 + $0x10] sm:$0xff]
      %v452 = vld [vmem:[%s5 + $0x18] sm:$0xff]
      %v453 = vld [vmem:[%s5 + $0x20] sm:$0xff]
      %v454 = vld [vmem:[%s5 + $0x28] sm:$0xff]
      %v455 = vld [vmem:[%s5 + $0x30] sm:$0xff]
      %v456 = vld [vmem:[%s5 + $0x38] sm:$0xff]
      %v457 = vld [vmem:[%s5 + $0x40] sm:$0xff]
      %v458 = vld [vmem:[%s5 + $0x48] sm:$0xff]
      %v459 = vld [vmem:[%s5 + $0x50] sm:$0xff]
      %v460 = vld [vmem:[%s5 + $0x58] sm:$0xff]
      %v461 = vld [vmem:[%s5 + $0x60] sm:$0xff]
      %v462 = vld [vmem:[%s5 + $0x68] sm:$0xff]
      %v463 = vld [vmem:[%s5 + $0x70] sm:$0xff]
      %v464 = vld [vmem:[%s5 + $0x78] sm:$0xff]
      %v465 = vld [vmem:[%s5 + $0x80] sm:$0xff]
      %v466 = vld [vmem:[%s5 + $0x88] sm:$0xff]
      %v467 = vld [vmem:[%s5 + $0x90] sm:$0xff]
      %v468 = vld [vmem:[%s5 + $0x98] sm:$0xff]
      %v469 = vld [vmem:[%s5 + $0xa0] sm:$0xff]
      %v470 = vld [vmem:[%s5 + $0xa8] sm:$0xff]
      %v471 = vld [vmem:[%s5 + $0xb0] sm:$0xff]
      %v472 = vld [vmem:[%s5 + $0xb8] sm:$0xff]
      %v473 = vld [vmem:[%s5 + $0xc0] sm:$0xff]
      %v474 = vld [vmem:[%s5 + $0xc8] sm:$0xff]
      %v475 = vld [vmem:[%s5 + $0xd0] sm:$0xff]
      %v476 = vld [vmem:[%s5 + $0xd8] sm:$0xff]
      %v477 = vld [vmem:[%s5 + $0xe0] sm:$0xff]
      %v478 = vld [vmem:[%s5 + $0xe8] sm:$0xff]
      %v479 = vld [vmem:[%s5 + $0xf0] sm:$0xff]
      %v480 = vld [vmem:[%s5 + $0xf8] sm:$0xff]
      %v481 = vld [vmem:[%s6] sm:$0x1]
      %v483 = vlaneseq
      %v484 = vshrl.u32 %v483, 7
      %v485 = vsub.s32 0, %v484
      %v486 = vrot.slane %v481, %v485
      %488 = vmatprep.subr.mxu0 0.0
      %489 = vmatpush1.msra.mxu0 %v464
      %490 = vmatprep.subr.mxu0 0.0
      %491 = vmatpush1.msra.mxu0 %v463
      %492 = vmatprep.subr.mxu0 0.0
      %493 = vmatpush1.msra.mxu0 %v462
      %494 = vmatprep.subr.mxu0 0.0
      %495 = vmatpush1.msra.mxu0 %v461
      %496 = vmatprep.subr.mxu0 0.0
      %497 = vmatpush1.msra.mxu0 %v460
      %498 = vmatprep.subr.mxu0 0.0
      %499 = vmatpush1.msra.mxu0 %v459
      %500 = vmatprep.subr.mxu0 0.0
      %501 = vmatpush1.msra.mxu0 %v458
      %502 = vmatprep.subr.mxu0 0.0
      %503 = vmatpush1.msra.mxu0 %v457
      %504 = vmatprep.subr.mxu0 0.0
      %505 = vmatpush1.msra.mxu0 %v456
      %506 = vmatprep.subr.mxu0 0.0
      %507 = vmatpush1.msra.mxu0 %v455
      %508 = vmatprep.subr.mxu0 0.0
      %509 = vmatpush1.msra.mxu0 %v454
      %510 = vmatprep.subr.mxu0 0.0
      %511 = vmatpush1.msra.mxu0 %v453
      %512 = vmatprep.subr.mxu0 0.0
      %513 = vmatpush1.msra.mxu0 %v452
      %514 = vmatprep.subr.mxu0 0.0
      %515 = vmatpush1.msra.mxu0 %v451
      %516 = vmatprep.subr.mxu0 0.0
      %517 = vmatpush1.msra.mxu0 %v450
      %518 = vmatprep.subr.mxu0 0.0
      %519 = vmatpush1.msra.mxu0 %v449
      %520 = vmatprep.subr.mxu0 0.0
      %521 = vmatpush2.msra.mxu0 %v480
      %522 = vmatprep.subr.mxu0 0.0
      %523 = vmatpush2.msra.mxu0 %v479
      %524 = vmatprep.subr.mxu0 0.0
      %525 = vmatpush2.msra.mxu0 %v478
      %526 = vmatprep.subr.mxu0 0.0
      %527 = vmatpush2.msra.mxu0 %v477
      %528 = vmatprep.subr.mxu0 0.0
      %529 = vmatpush2.msra.mxu0 %v476
      %530 = vmatprep.subr.mxu0 0.0
      %531 = vmatpush2.msra.mxu0 %v475
      %532 = vmatprep.subr.mxu0 0.0
      %533 = vmatpush2.msra.mxu0 %v474
      %534 = vmatprep.subr.mxu0 0.0
      %535 = vmatpush2.msra.mxu0 %v473
      %536 = vmatprep.subr.mxu0 0.0
      %537 = vmatpush2.msra.mxu0 %v472
      %538 = vmatprep.subr.mxu0 0.0
      %539 = vmatpush2.msra.mxu0 %v471
      %540 = vmatprep.subr.mxu0 0.0
      %541 = vmatpush2.msra.mxu0 %v470
      %542 = vmatprep.subr.mxu0 0.0
      %543 = vmatpush2.msra.mxu0 %v469
      %544 = vmatprep.subr.mxu0 0.0
      %545 = vmatpush2.msra.mxu0 %v468
      %546 = vmatprep.subr.mxu0 0.0
      %547 = vmatpush2.msra.mxu0 %v467
      %548 = vmatprep.subr.mxu0 0.0
      %549 = vmatpush2.msra.mxu0 %v466
      %550 = vmatprep.subr.mxu0 0.0
      %551 = vmatpush2.msra.mxu0 %v465
      %552 = vmatprep.mubr.f32.mxu0 %v447
      %553 = vmatmul.mubr.f32.gmra.mxu0 %v445
      %v554 = vpop.f32.mrf.mxu0
      %v555 = vadd.f32 %v486, %v554
      %v556 = vpop.f32.mrf.mxu0
      %557 = vdwg.mxu0
      %vm558 = vcmask 39936
      %559 = vst.msk [vmem:[%s273] sm:$0xff] %vm558, %v555
      %p560 = scmp.lt.s32.totalorder %s18, 1
      %s561 = scalar_select %p560, %s18, 1
      %s562 = smul.addr %s561, 8
      %s563 = scalar_lea.vmem %s7, %s562
      // Predicated region
      $region49: #{tpu_custom_call.1} parent=47 // pred_check
        %p564 = pneg %p188
      $region50: #{tpu_custom_call.1} parent=47 // pred_check_branch
        %566 = sbr.rel (%p564) target = $region52
      $region51: #{tpu_custom_call.1} parent=47 // pred_region
        _
      $region52: #{tpu_custom_call.1} parent=47 // pred_fallthru
        _
    $region48: #{tpu_custom_call.1} parent=5 // pred_fallthru
      _
    %p567 = scmp.le.s32.totalorder 2, %s13
    // Predicated region
    $region53: #{tpu_custom_call.1} parent=5 // pred_check
      %p568 = pneg %p567
    $region54: #{tpu_custom_call.1} parent=5 // pred_check_branch
      %570 = sbr.rel (%p568) target = $region56
    $region55: #{tpu_custom_call.1} parent=5 // pred_region
      %s571 = ssub.s32 %s13, 2
      // Predicated region
      $region57: #{tpu_custom_call.1} parent=55 // pred_check
        %p572 = pneg %p194
      $region58: #{tpu_custom_call.1} parent=55 // pred_check_branch
        %574 = sbr.rel (%p572) target = $region60
      $region59: #{tpu_custom_call.1} parent=55 // pred_region
        %p575 = scmp.lt.s32.totalorder %s19, 1
        %s576 = scalar_select %p575, %s19, 1
        %s577 = smul.addr %s576, 8
        %s578 = scalar_lea.vmem %s7, %s577
      $region60: #{tpu_custom_call.1} parent=55 // pred_fallthru
        _
    $region56: #{tpu_custom_call.1} parent=5 // pred_fallthru
      _
  $region6: #{tpu_custom_call.1} parent=0 // loop_footer
    %s17 = sadd.s32 1, %s13
  $region7: #{tpu_custom_call.1} parent=0 // loop_footer_branch
    %12 = sbr.rel target = $region3
  $region8: #{tpu_custom_call.1} parent=0 // loop_exit
    _

</llo_original>
